<compile_context>
chip_gen: v6e
topology: v6e:2x2x1
jax: 0.10.0
libtpu: 0.0.40
codegen_flags: <defaults>
</compile_context>

<pallas_src>
import functools

import jax
import jax.numpy as jnp
from jax import lax
from jax.experimental import pallas as pl
from jax.experimental.pallas import tpu as pltpu

_LANES = 128
_SUBLANES = 8
_CHUNK_ROWS = 64            # sub-chunk rows: intermediates stay register-resident
_MAX_ROW_TILE = 4096        # (4096,128) f32 block = 2 MiB; 2 inputs x 2 bufs = 8 MiB
_LOG_CLAMP = -100.0         # PyTorch binary_cross_entropy clamps log terms at -100
_VMEM_LIMIT_BYTES = 24 * 1024 * 1024


def _round_up(a, b):
    return (a + b - 1) // b * b


def _elementwise_pieces(x, t, *, in_kernel):
    """Per-element f32 (p*t, p, t, bce) with PyTorch's -100 log clamp.

    Stable log-sigmoid form: 1 exp + 1 log on the EUP. The sigmoid reciprocal
    uses the EUP approx seed + one Newton-Raphson step (VALU) inside kernels.
    NOTE: for |x| >~ 16.6 (where f32 sigmoid saturates to exactly 0/1) PyTorch's
    clamp path returns -100 while this stable form returns ~ -|x|; the stable
    form is more accurate but diverges from the module on extreme logits.
    """
    e = jnp.exp(-jnp.abs(x))                  # exp(-|x|) in (0, 1]
    d = 1.0 + e
    lp1 = jnp.log(d)                          # softplus(-|x|)
    if in_kernel:
        inv = pl.reciprocal(d, approx=True)   # EUP seed (free slot)
        inv = inv * (2.0 - d * inv)           # one NR step -> ~f32 accuracy
    else:
        inv = 1.0 / d
    p = jnp.where(x >= 0.0, 1.0, e) * inv     # sigmoid(x)
    log_p = jnp.maximum(jnp.minimum(x, 0.0) - lp1, _LOG_CLAMP)     # log(sigmoid)
    log_1mp = jnp.maximum(jnp.minimum(-x, 0.0) - lp1, _LOG_CLAMP)  # log(1-sigmoid)
    bce = -(t * (log_p - log_1mp) + log_1mp)
    return p * t, p, t, bce


def _dice_bce_kernel(x_ref, t_ref, acc_ref, *, blocks_per_part, total_blocks,
                     rows_valid_last, chunk_rows, needs_mask, needs_guard):
    """Accumulate (intersection, sum sigmoid, sum target, sum BCE) partial sums
    into the VMEM-resident (4, 8, 128) output block across the reduction axis."""
    p_idx = pl.program_id(0)          # partition ("parallel") axis
    i = pl.program_id(1)              # reduction ("arbitrary") axis
    block_idx = p_idx * blocks_per_part + i
    row_tile = x_ref.shape[0]

    @pl.when(i == 0)
    def _init():
        acc_ref[...] = jnp.zeros_like(acc_ref)

    def accumulate(valid_rows):
        num_chunks = row_tile // chunk_rows
        groups = chunk_rows // _SUBLANES
        align = chunk_rows & -chunk_rows          # largest pow-2 divisor (>= 8)

        def fold(v):
            # (chunk_rows,128) -> (8,128): whole-vreg VPU adds, no XLU work.
            return v.reshape(groups, _SUBLANES, _LANES).sum(axis=0)

        def chunk_sums(r0):
            x = x_ref[pl.ds(r0, chunk_rows), :].astype(jnp.float32)
            t = t_ref[pl.ds(r0, chunk_rows), :].astype(jnp.float32)
            if valid_rows is not None:
                row = r0 + lax.broadcasted_iota(jnp.int32, (chunk_rows, _LANES), 0)
                ok = row < valid_rows
                # Partial-block contents are unspecified: zero before exp/log so
                # garbage (NaN/Inf) can't poison the accumulator.
                x = jnp.where(ok, x, 0.0)
                t = jnp.where(ok, t, 0.0)
            pt, p, tt, bce = _elementwise_pieces(x, t, in_kernel=True)
            if valid_rows is not None:
                p = jnp.where(ok, p, 0.0)         # mask sigmoid(0)=0.5 padding
                bce = jnp.where(ok, bce, 0.0)     # mask -log(0.5) padding
                # pt and tt are already 0 where invalid (t == 0 there).
            return fold(pt), fold(p), fold(tt), fold(bce)

        if num_chunks == 1:
            sums = chunk_sums(0)
        else:
            def body(c, carry):
                r0 = pl.multiple_of(c * chunk_rows, align)
                return tuple(a + b for a, b in zip(carry, chunk_sums(r0)))
            zero = jnp.zeros((_SUBLANES, _LANES), jnp.float32)
            sums = lax.fori_loop(0, num_chunks, body, (zero,) * 4,
                                 unroll=min(8, num_chunks))

        acc_ref[0] += sums[0]
        acc_ref[1] += sums[1]
        acc_ref[2] += sums[2]
        acc_ref[3] += sums[3]

    if needs_mask:
        last = total_blocks - 1
        if total_blocks > 1:
            @pl.when(block_idx < last)            # fast path: no mask work
            def _full_blocks():
                accumulate(None)

        @pl.when(block_idx == last)               # slow path: one block per call
        def _partial_block():
            accumulate(rows_valid_last)
        # block_idx > last (padded step of an odd split) falls through -> skipped.
    elif needs_guard:
        @pl.when(block_idx < total_blocks)        # skip the padded step
        def _guarded():
            accumulate(None)
    else:
        accumulate(None)


def _tail_sums(x, t):
    """Plain-JAX partial sums for the <=127-element non-128-aligned tail."""
    pt, p, tt, bce = _elementwise_pieces(
        x.astype(jnp.float32), t.astype(jnp.float32), in_kernel=False)
    return jnp.stack([pt.sum(), p.sum(), tt.sum(), bce.sum()])


@functools.partial(jax.jit, static_argnames=("weight", "smooth", "max_row_tile"))
def dice_bce_loss(inputs, targets, *, weight=0.5, smooth=1.0,
                  max_row_tile=_MAX_ROW_TILE):
    """JAX/Pallas equivalent of DiceBCELoss.forward (class_weights=None).

    inputs:  raw logits, any shape (e.g. NCHW [B, C, H, W]), any float dtype
    targets: same shape, values in [0, 1]
    """
    n = inputs.size
    x = inputs.reshape(-1)          # native dtype; upcast happens per chunk
    t = targets.reshape(-1)

    rows = n // _LANES              # full 128-wide rows -> Pallas kernel
    tail = n - rows * _LANES        # <=127 trailing elements -> plain JAX

    sums = jnp.zeros((4,), jnp.float32)

    if rows > 0:
        # No zero-pad concatenate: the kernel consumes the 128-aligned prefix
        # (a no-op slice in the common aligned case).
        xk = x[: rows * _LANES].reshape(rows, _LANES)
        tk = t[: rows * _LANES].reshape(rows, _LANES)

        # Sublane rounding follows dtype packing: 8 (32-bit), 16 (16-bit), 32 (8-bit).
        itemsize = min(int(jnp.dtype(inputs.dtype).itemsize),
                       int(jnp.dtype(targets.dtype).itemsize))
        sub = max(_SUBLANES, 32 // max(itemsize, 1))

        row_tile = min(int(max_row_tile), _round_up(rows, sub))
        if row_tile >= _CHUNK_ROWS:
            row_tile = _round_up(row_tile, _CHUNK_ROWS)   # 64 is a mult. of 8/16/32
            chunk_rows = _CHUNK_ROWS
        else:
            chunk_rows = row_tile

        total_blocks = pl.cdiv(rows, row_tile)
        # Always split across 2 partitions when >= 2 blocks so both v7x
        # TensorCores get work; serial no-op on single-TC v5e/v6e.
        n_parts = 2 if total_blocks >= 2 else 1
        blocks_per_part = pl.cdiv(total_blocks, n_parts)
        needs_guard = n_parts * blocks_per_part != total_blocks   # odd split
        needs_mask = (rows % row_tile) != 0                       # partial last block
        rows_valid_last = rows - (total_blocks - 1) * row_tile

        if needs_guard:
            # Clamp so the padded grid step re-fetches a valid block (compute
            # for it is skipped in-kernel via pl.when).
            def in_map(p, i):
                return (jnp.minimum(p * blocks_per_part + i, total_blocks - 1), 0)
        else:
            def in_map(p, i):
                return (p * blocks_per_part + i, 0)

        kernel = functools.partial(
            _dice_bce_kernel,
            blocks_per_part=blocks_per_part, total_blocks=total_blocks,
            rows_valid_last=rows_valid_last, chunk_rows=chunk_rows,
            needs_mask=needs_mask, needs_guard=needs_guard)

        acc = pl.pallas_call(
            kernel,
            out_shape=jax.ShapeDtypeStruct((n_parts, 4, _SUBLANES, _LANES),
                                           jnp.float32),
            grid_spec=pltpu.PrefetchScalarGridSpec(
                num_scalar_prefetch=0,
                grid=(n_parts, blocks_per_part),
                in_specs=[pl.BlockSpec((row_tile, _LANES), in_map),
                          pl.BlockSpec((row_tile, _LANES), in_map)],
                out_specs=pl.BlockSpec((None, 4, _SUBLANES, _LANES),
                                       lambda p, i: (p, 0, 0, 0)),
            ),
            compiler_params=pltpu.CompilerParams(
                dimension_semantics=("parallel", "arbitrary"),
                vmem_limit_bytes=_VMEM_LIMIT_BYTES,
            ),
        )(xk, tk)

        sums = sums + jnp.sum(acc, axis=(0, 2, 3))      # tiny final collapse

    if tail:
        sums = sums + _tail_sums(x[rows * _LANES:], t[rows * _LANES:])

    intersection, sum_p, sum_t, bce_sum = sums[0], sums[1], sums[2], sums[3]
    dice_loss = 1.0 - (2.0 * intersection + smooth) / (sum_p + sum_t + smooth)
    bce = bce_sum / n
    # TODO(synk): class_weights path (weights = class_weights[targets.long()])
    # is not implemented; this reproduces the default class_weights=None branch.
    return weight * bce + (1.0 - weight) * dice_loss


def _reference(inputs, targets, weight=0.5, smooth=1.0):
    """Pure-JAX transcription of the PyTorch forward (class_weights=None)."""
    p = jax.nn.sigmoid(inputs.astype(jnp.float32)).reshape(-1)
    t = targets.astype(jnp.float32).reshape(-1)
    inter = jnp.sum(p * t)
    dice = 1.0 - (2.0 * inter + smooth) / (jnp.sum(p) + jnp.sum(t) + smooth)
    log_p = jnp.maximum(jnp.log(p), _LOG_CLAMP)
    log_1mp = jnp.maximum(jnp.log(1.0 - p), _LOG_CLAMP)
    bce = jnp.mean(-(t * log_p + (1.0 - t) * log_1mp))
    return weight * bce + (1.0 - weight) * dice


if __name__ == "__main__":
    root = jax.random.PRNGKey(0)

    # Deterministic mixture weight (the PyTorch module would crash with weight=None).
    WEIGHT = 0.5

    def run_case(key, shape, dtype=jnp.float32, max_row_tile=_MAX_ROW_TILE):
        k1, k2 = jax.random.split(key)
        logits = (jax.random.normal(k1, shape, jnp.float32) * 2.0).astype(dtype)
        masks = (jax.random.uniform(k2, shape) > 0.5).astype(dtype)
        out = dice_bce_loss(logits, masks, weight=WEIGHT, smooth=1.0,
                            max_row_tile=max_row_tile)
        out = jax.block_until_ready(out)
        ref = _reference(logits, masks, weight=WEIGHT, smooth=1.0)
        assert jnp.allclose(out, ref, rtol=1e-4, atol=1e-4), (shape, dtype, out, ref)
        return out

    keys = jax.random.split(root, 5)
    # Primary case: small NCHW logits / binary masks, 128-aligned (copy-free path).
    run_case(keys[0], (2, 4, 16, 16))
    # Misaligned numel -> masked last block + <=127-element plain-JAX tail.
    run_case(keys[1], (2, 4, 23, 13))
    # Multi-block, odd block count -> 2-way partition, clamped index_map, skipped step.
    run_case(keys[2], (1, 3, 40, 40), max_row_tile=16)
    # bf16 inputs -> 16-row sublane rounding + per-chunk upcast.
    run_case(keys[3], (2, 4, 30, 30), dtype=jnp.bfloat16)
    # >1 sub-chunk per block -> exercises the fori_loop chunk accumulation path.
    run_case(keys[4], (2, 1, 80, 80))

    print("KERNEL_OK")
</pallas_src>

<mosaic_0001>
module attributes {stable_mosaic.version = 11 : i64} {
  func.func @_dice_bce_kernel(%arg0: i32, %arg1: i32, %arg2: memref<16x128xf32, #tpu.memory_space<vmem>>, %arg3: memref<16x128xf32, #tpu.memory_space<vmem>>, %arg4: memref<1x4x8x128xf32, #tpu.memory_space<vmem>>) attributes {dimension_semantics = [#tpu.dimension_semantics<parallel>, #tpu.dimension_semantics<arbitrary>], iteration_bounds = array<i64: 1, 1>, scalar_prefetch = 0 : i64, scratch_operands = 0 : i64, tpu.core_type = #tpu.core_type<tc>, window_params = [{transform_indices = @transform_0, window_bounds = array<i64: 16, 128>}, {transform_indices = @transform_1, window_bounds = array<i64: 16, 128>}, {transform_indices = @transform_2, window_bounds = array<i64: 1, 4, 8, 128>}]} {
    %c0_i32 = arith.constant 0 : i32
    %0 = arith.cmpi eq, %arg1, %c0_i32 : i32
    %1 = arith.extui %0 : i1 to i32
    %c0_i32_0 = arith.constant 0 : i32
    %2 = arith.cmpi ne, %1, %c0_i32_0 : i32
    scf.if %2 {
      %cst_47 = arith.constant 0.000000e+00 : f32
      %72 = vector.broadcast %cst_47 : f32 to vector<4x8x128xf32>
      %c0_48 = arith.constant 0 : index
      %c0_49 = arith.constant 0 : index
      %c0_50 = arith.constant 0 : index
      %c0_51 = arith.constant 0 : index
      %73 = vector.load %arg4[%c0_48, %c0_49, %c0_50, %c0_51] : memref<1x4x8x128xf32, #tpu.memory_space<vmem>>, vector<1x4x8x128xf32>
      %74 = vector.shape_cast %73 : vector<1x4x8x128xf32> to vector<4x8x128xf32>
      %75 = vector.shape_cast %72 : vector<4x8x128xf32> to vector<1x4x8x128xf32>
      tpu.vector_store %arg4[%c0_48, %c0_49, %c0_50, %c0_51], %75 {strides = array<i32>} : memref<1x4x8x128xf32, #tpu.memory_space<vmem>>, vector<1x4x8x128xf32>,
    } else {
    }
    %c0 = arith.constant 0 : index
    %c0_1 = arith.constant 0 : index
    %3 = vector.load %arg2[%c0, %c0_1] : memref<16x128xf32, #tpu.memory_space<vmem>>, vector<16x128xf32>
    %c0_2 = arith.constant 0 : index
    %c0_3 = arith.constant 0 : index
    %4 = vector.load %arg3[%c0_2, %c0_3] : memref<16x128xf32, #tpu.memory_space<vmem>>, vector<16x128xf32>
    %5 = math.absf %3 : vector<16x128xf32>
    %cst = arith.constant 0.000000e+00 : f32
    %6 = vector.broadcast %cst : f32 to vector<16x128xf32>
    %7 = arith.subf %6, %5 : vector<16x128xf32>
    %8 = math.exp %7 : vector<16x128xf32>
    %cst_4 = arith.constant 1.000000e+00 : f32
    %9 = vector.broadcast %cst_4 : f32 to vector<16x128xf32>
    %10 = arith.addf %9, %8 : vector<16x128xf32>
    %11 = math.log %10 : vector<16x128xf32>
    %12 = tpu.reciprocal %10 {approx = true} : vector<16x128xf32> -> vector<16x128xf32>
    %13 = arith.mulf %10, %12 : vector<16x128xf32>
    %cst_5 = arith.constant 2.000000e+00 : f32
    %14 = vector.broadcast %cst_5 : f32 to vector<16x128xf32>
    %15 = arith.subf %14, %13 : vector<16x128xf32>
    %16 = arith.mulf %12, %15 : vector<16x128xf32>
    %cst_6 = arith.constant 0.000000e+00 : f32
    %17 = vector.broadcast %cst_6 : f32 to vector<16x128xf32>
    %18 = arith.cmpf oge, %3, %17 : vector<16x128xf32>
    %cst_7 = arith.constant 1.000000e+00 : f32
    %19 = vector.broadcast %cst_7 : f32 to vector<16x128xf32>
    %20 = arith.select %18, %19, %8 : vector<16x128xi1>, vector<16x128xf32>
    %21 = arith.mulf %20, %16 : vector<16x128xf32>
    %cst_8 = arith.constant 0.000000e+00 : f32
    %22 = vector.broadcast %cst_8 : f32 to vector<16x128xf32>
    %23 = arith.minimumf %3, %22 : vector<16x128xf32>
    %24 = arith.subf %23, %11 : vector<16x128xf32>
    %cst_9 = arith.constant -1.000000e+02 : f32
    %25 = vector.broadcast %cst_9 : f32 to vector<16x128xf32>
    %26 = arith.maximumf %24, %25 : vector<16x128xf32>
    %cst_10 = arith.constant 0.000000e+00 : f32
    %27 = vector.broadcast %cst_10 : f32 to vector<16x128xf32>
    %28 = arith.subf %27, %3 : vector<16x128xf32>
    %cst_11 = arith.constant 0.000000e+00 : f32
    %29 = vector.broadcast %cst_11 : f32 to vector<16x128xf32>
    %30 = arith.minimumf %28, %29 : vector<16x128xf32>
    %31 = arith.subf %30, %11 : vector<16x128xf32>
    %cst_12 = arith.constant -1.000000e+02 : f32
    %32 = vector.broadcast %cst_12 : f32 to vector<16x128xf32>
    %33 = arith.maximumf %31, %32 : vector<16x128xf32>
    %34 = arith.subf %26, %33 : vector<16x128xf32>
    %35 = arith.mulf %4, %34 : vector<16x128xf32>
    %36 = arith.addf %35, %33 : vector<16x128xf32>
    %cst_13 = arith.constant 0.000000e+00 : f32
    %37 = vector.broadcast %cst_13 : f32 to vector<16x128xf32>
    %38 = arith.subf %37, %36 : vector<16x128xf32>
    %39 = arith.mulf %21, %4 : vector<16x128xf32>
    %40 = vector.shape_cast %39 : vector<16x128xf32> to vector<2x8x128xf32>
    %cst_14 = arith.constant dense<0.000000e+00> : vector<8x128xf32>
    %41 = vector.multi_reduction <add>, %40, %cst_14 [0] : vector<2x8x128xf32> to vector<8x128xf32>
    %42 = vector.shape_cast %21 : vector<16x128xf32> to vector<2x8x128xf32>
    %cst_15 = arith.constant dense<0.000000e+00> : vector<8x128xf32>
    %43 = vector.multi_reduction <add>, %42, %cst_15 [0] : vector<2x8x128xf32> to vector<8x128xf32>
    %44 = vector.shape_cast %4 : vector<16x128xf32> to vector<2x8x128xf32>
    %cst_16 = arith.constant dense<0.000000e+00> : vector<8x128xf32>
    %45 = vector.multi_reduction <add>, %44, %cst_16 [0] : vector<2x8x128xf32> to vector<8x128xf32>
    %46 = vector.shape_cast %38 : vector<16x128xf32> to vector<2x8x128xf32>
    %cst_17 = arith.constant dense<0.000000e+00> : vector<8x128xf32>
    %47 = vector.multi_reduction <add>, %46, %cst_17 [0] : vector<2x8x128xf32> to vector<8x128xf32>
    %c0_18 = arith.constant 0 : index
    %c0_19 = arith.constant 0 : index
    %c0_20 = arith.constant 0 : index
    %c0_21 = arith.constant 0 : index
    %48 = vector.load %arg4[%c0_18, %c0_19, %c0_20, %c0_21] : memref<1x4x8x128xf32, #tpu.memory_space<vmem>>, vector<1x1x8x128xf32>
    %49 = vector.shape_cast %48 : vector<1x1x8x128xf32> to vector<8x128xf32>
    %50 = arith.addf %49, %41 : vector<8x128xf32>
    %c0_22 = arith.constant 0 : index
    %c0_23 = arith.constant 0 : index
    %c0_24 = arith.constant 0 : index
    %c0_25 = arith.constant 0 : index
    %51 = vector.load %arg4[%c0_22, %c0_23, %c0_24, %c0_25] : memref<1x4x8x128xf32, #tpu.memory_space<vmem>>, vector<1x1x8x128xf32>
    %52 = vector.shape_cast %51 : vector<1x1x8x128xf32> to vector<8x128xf32>
    %53 = vector.shape_cast %50 : vector<8x128xf32> to vector<1x1x8x128xf32>
    tpu.vector_store %arg4[%c0_22, %c0_23, %c0_24, %c0_25], %53 {strides = array<i32>} : memref<1x4x8x128xf32, #tpu.memory_space<vmem>>, vector<1x1x8x128xf32>,
    %c0_26 = arith.constant 0 : index
    %c1 = arith.constant 1 : index
    %c0_27 = arith.constant 0 : index
    %c0_28 = arith.constant 0 : index
    %54 = vector.load %arg4[%c0_26, %c1, %c0_27, %c0_28] : memref<1x4x8x128xf32, #tpu.memory_space<vmem>>, vector<1x1x8x128xf32>
    %55 = vector.shape_cast %54 : vector<1x1x8x128xf32> to vector<8x128xf32>
    %56 = arith.addf %55, %43 : vector<8x128xf32>
    %c0_29 = arith.constant 0 : index
    %c1_30 = arith.constant 1 : index
    %c0_31 = arith.constant 0 : index
    %c0_32 = arith.constant 0 : index
    %57 = vector.load %arg4[%c0_29, %c1_30, %c0_31, %c0_32] : memref<1x4x8x128xf32, #tpu.memory_space<vmem>>, vector<1x1x8x128xf32>
    %58 = vector.shape_cast %57 : vector<1x1x8x128xf32> to vector<8x128xf32>
    %59 = vector.shape_cast %56 : vector<8x128xf32> to vector<1x1x8x128xf32>
    tpu.vector_store %arg4[%c0_29, %c1_30, %c0_31, %c0_32], %59 {strides = array<i32>} : memref<1x4x8x128xf32, #tpu.memory_space<vmem>>, vector<1x1x8x128xf32>,
    %c0_33 = arith.constant 0 : index
    %c2 = arith.constant 2 : index
    %c0_34 = arith.constant 0 : index
    %c0_35 = arith.constant 0 : index
    %60 = vector.load %arg4[%c0_33, %c2, %c0_34, %c0_35] : memref<1x4x8x128xf32, #tpu.memory_space<vmem>>, vector<1x1x8x128xf32>
    %61 = vector.shape_cast %60 : vector<1x1x8x128xf32> to vector<8x128xf32>
    %62 = arith.addf %61, %45 : vector<8x128xf32>
    %c0_36 = arith.constant 0 : index
    %c2_37 = arith.constant 2 : index
    %c0_38 = arith.constant 0 : index
    %c0_39 = arith.constant 0 : index
    %63 = vector.load %arg4[%c0_36, %c2_37, %c0_38, %c0_39] : memref<1x4x8x128xf32, #tpu.memory_space<vmem>>, vector<1x1x8x128xf32>
    %64 = vector.shape_cast %63 : vector<1x1x8x128xf32> to vector<8x128xf32>
    %65 = vector.shape_cast %62 : vector<8x128xf32> to vector<1x1x8x128xf32>
    tpu.vector_store %arg4[%c0_36, %c2_37, %c0_38, %c0_39], %65 {strides = array<i32>} : memref<1x4x8x128xf32, #tpu.memory_space<vmem>>, vector<1x1x8x128xf32>,
    %c0_40 = arith.constant 0 : index
    %c3 = arith.constant 3 : index
    %c0_41 = arith.constant 0 : index
    %c0_42 = arith.constant 0 : index
    %66 = vector.load %arg4[%c0_40, %c3, %c0_41, %c0_42] : memref<1x4x8x128xf32, #tpu.memory_space<vmem>>, vector<1x1x8x128xf32>
    %67 = vector.shape_cast %66 : vector<1x1x8x128xf32> to vector<8x128xf32>
    %68 = arith.addf %67, %47 : vector<8x128xf32>
    %c0_43 = arith.constant 0 : index
    %c3_44 = arith.constant 3 : index
    %c0_45 = arith.constant 0 : index
    %c0_46 = arith.constant 0 : index
    %69 = vector.load %arg4[%c0_43, %c3_44, %c0_45, %c0_46] : memref<1x4x8x128xf32, #tpu.memory_space<vmem>>, vector<1x1x8x128xf32>
    %70 = vector.shape_cast %69 : vector<1x1x8x128xf32> to vector<8x128xf32>
    %71 = vector.shape_cast %68 : vector<8x128xf32> to vector<1x1x8x128xf32>
    tpu.vector_store %arg4[%c0_43, %c3_44, %c0_45, %c0_46], %71 {strides = array<i32>} : memref<1x4x8x128xf32, #tpu.memory_space<vmem>>, vector<1x1x8x128xf32>,
    return
  }
  func.func @transform_0(%arg0: i32, %arg1: i32) -> (i32, i32) {
    %c1_i32 = arith.constant 1 : i32
    %0 = arith.muli %arg0, %c1_i32 : i32
    %1 = arith.addi %0, %arg1 : i32
    %c0_i32 = arith.constant 0 : i32
    %c0_i32_0 = arith.constant 0 : i32
    return %1, %c0_i32 : i32, i32
  }
  func.func @transform_1(%arg0: i32, %arg1: i32) -> (i32, i32) {
    %c1_i32 = arith.constant 1 : i32
    %0 = arith.muli %arg0, %c1_i32 : i32
    %1 = arith.addi %0, %arg1 : i32
    %c0_i32 = arith.constant 0 : i32
    %c0_i32_0 = arith.constant 0 : i32
    return %1, %c0_i32 : i32, i32
  }
  func.func @transform_2(%arg0: i32, %arg1: i32) -> (i32, i32, i32, i32) {
    %c0_i32 = arith.constant 0 : i32
    %c0_i32_0 = arith.constant 0 : i32
    %c0_i32_1 = arith.constant 0 : i32
    %c0_i32_2 = arith.constant 0 : i32
    return %arg0, %c0_i32, %c0_i32_0, %c0_i32_1 : i32, i32, i32, i32
  }
}

</mosaic_0001>

<llo_original>
// kernel: dice_bce_loss.1
$region0: #{dice_bce_loss.1}
  #allocation0 [shape = 'u32[]', space=smem, size = 0x4, offset = 0x4, fixed_abs, tag = 'smem constant byte address 0x4 - core index']
  #allocation1 [shape = 'u32[144,128]{1,0:T(1,128)}', space=vmem, size = 0x12000, scoped, tag = 'internal scratch']
  %s0 = inlined_call_operand.vmem [shape: f32[16,128], index: 0, kind: input, shape index: {}]
  %s1 = inlined_call_operand.vmem [shape: f32[16,128], index: 1, kind: input, shape index: {}]
  %s2 = inlined_call_operand.vmem [shape: f32[1,4,8,128], index: 2, kind: output, shape index: {}]
  %s3 = sld [smem:[#allocation0]]
  $region22: #{dice_bce_loss.1} parent=0
    _
  %s5 = ssub.s32 1, %s3
  %s6 = scalar_select 0, %s5, %s3
  // Predicated region
  $region2: #{dice_bce_loss.1} parent=0 // pred_check
    _
  $region3: #{dice_bce_loss.1} parent=0 // pred_check_branch
    %8 = sbr.rel (0) target = $region5
  $region4: #{dice_bce_loss.1} parent=0 // pred_region
    %s9 = sadd.s32 0, 0
    %s10 = smul.u32 2, %s9
    %p11 = scmp.lt.s32.totalorder %s10, 1
    %s12 = scalar_select %p11, %s10, 1
    %s13 = smul.addr %s12, 8
    %s14 = scalar_lea.vmem %s0, %s13
    %s15 = sadd.s32 0, 0
    %s16 = smul.u32 2, %s15
  $region5: #{dice_bce_loss.1} parent=0 // pred_fallthru
    _
  // Predicated region
  $region6: #{dice_bce_loss.1} parent=0 // pred_check
    _
  $region7: #{dice_bce_loss.1} parent=0 // pred_check_branch
    %18 = sbr.rel (0) target = $region9
  $region8: #{dice_bce_loss.1} parent=0 // pred_region
    %s19 = sadd.s32 0, 0
    %s20 = smul.u32 2, %s19
    %p21 = scmp.lt.s32.totalorder %s20, 1
    %s22 = scalar_select %p21, %s20, 1
    %s23 = smul.addr %s22, 8
    %s24 = scalar_lea.vmem %s1, %s23
    %s25 = sadd.s32 0, 0
    %s26 = smul.u32 2, %s25
  $region9: #{dice_bce_loss.1} parent=0 // pred_fallthru
    _
  %s27 = sadd.s32 0, 0
  %s28 = smul.u32 2, %s27
  %p29 = scmp.lt.s32.totalorder %s28, 1
  %s30 = scalar_select %p29, %s28, 1
  %s31 = smul.addr %s30, 8
  %s32 = scalar_lea.vmem %s0, %s31
  %s33 = sadd.s32 0, 0
  %s34 = smul.u32 2, %s33
  %p35 = scmp.lt.s32.totalorder %s34, 1
  %s36 = scalar_select %p35, %s34, 1
  %s37 = smul.addr %s36, 8
  %s38 = scalar_lea.vmem %s1, %s37
  %s39 = sadd.s32 0, 0
  %s40 = smul.u32 2, %s39
  %p41 = scmp.lt.s32.totalorder %s40, 1
  %s42 = scalar_select %p41, %s40, 1
  %s43 = smul.addr %s42, 8
  %s44 = scalar_lea.vmem %s0, %s43
  %s45 = sadd.s32 0, 0
  %s46 = smul.u32 2, %s45
  %s47 = sadd.s32 0, 0
  %s48 = smul.u32 2, %s47
  %p49 = scmp.lt.s32.totalorder %s48, 1
  %s50 = scalar_select %p49, %s48, 1
  %s51 = smul.addr %s50, 8
  %s52 = scalar_lea.vmem %s1, %s51
  %s53 = sadd.s32 0, 0
  %s54 = smul.u32 2, %s53
  %p55 = scmp.eq.s32.totalorder 0, 0
  // Predicated region
  $region10: #{dice_bce_loss.1} parent=0 // pred_check
    %p56 = pneg %p55
  $region11: #{dice_bce_loss.1} parent=0 // pred_check_branch
    %58 = sbr.rel (%p56) target = $region13
  $region12: #{dice_bce_loss.1} parent=0 // pred_region
    %59 = vst [vmem:[%s2] sm:$0xff] 0.0
    %60 = vst [vmem:[%s2 + $0x8] sm:$0xff] 0.0
    %61 = vst [vmem:[%s2 + $0x10] sm:$0xff] 0.0
    %62 = vst [vmem:[%s2 + $0x18] sm:$0xff] 0.0
  $region13: #{dice_bce_loss.1} parent=0 // pred_fallthru
    _
  %v63 = vld [vmem:[%s44] sm:$0xff]
  %v64 = vld [vmem:[%s44 + $0x8] sm:$0xff]
  %v65 = vld [vmem:[%s52] sm:$0xff]
  %v66 = vld [vmem:[%s52 + $0x8] sm:$0xff]
  %v67 = vand.u32 2147483647, %v63
  %v68 = vand.u32 2147483647, %v64
  %v69 = vsub.f32 0.0, %v67
  %v70 = vsub.f32 0.0, %v68
  %v71 = vmul.f32 %v69, 1.442695
  %v72 = vpow.pop %v71
  %v73 = vmul.f32 %v70, 1.442695
  %v74 = vpow.pop %v73
  %v75 = vadd.f32 %v72, 1.0
  %v76 = vadd.f32 %v74, 1.0
  %v77 = vlog2.pop %v75
  %v78 = vmul.f32 %v77, 0.6931472
  %v79 = vlog2.pop %v76
  %v80 = vmul.f32 %v79, 0.6931472
  %v81 = vrcp.pop %v75
  %v82 = vrcp.pop %v76
  %v83 = vmul.f32 %v75, %v81
  %v84 = vmul.f32 %v76, %v82
  %v85 = vsub.f32 2.0, %v83
  %v86 = vsub.f32 2.0, %v84
  %v87 = vmul.f32 %v81, %v85
  %v88 = vmul.f32 %v82, %v86
  %vm89 = vcmp.ge.f32.partialorder %v63, 0.0
  %vm90 = vcmp.ge.f32.partialorder %v64, 0.0
  %v91 = vsel %vm89, 1.0, %v72
  %v92 = vsel %vm90, 1.0, %v74
  %v93 = vmul.f32 %v91, %v87
  %v94 = vmul.f32 %v92, %v88
  %v95 = vmin.f32 %v63, 0.0
  %v96 = vmin.f32 %v64, 0.0
  %v97 = vsub.f32 %v95, %v78
  %v98 = vsub.f32 %v96, %v80
  %v99 = vmax.f32 %v97, -100.0
  %v100 = vmax.f32 %v98, -100.0
  %v101 = vsub.f32 0.0, %v63
  %v102 = vsub.f32 0.0, %v64
  %v103 = vmin.f32 %v101, 0.0
  %v104 = vmin.f32 %v102, 0.0
  %v105 = vsub.f32 %v103, %v78
  %v106 = vsub.f32 %v104, %v80
  %v107 = vmax.f32 %v105, -100.0
  %v108 = vmax.f32 %v106, -100.0
  %v109 = vsub.f32 %v99, %v107
  %v110 = vsub.f32 %v100, %v108
  %v111 = vmul.f32 %v65, %v109
  %v112 = vmul.f32 %v66, %v110
  %v113 = vadd.f32 %v111, %v107
  %v114 = vadd.f32 %v112, %v108
  %v115 = vsub.f32 0.0, %v113
  %v116 = vsub.f32 0.0, %v114
  %v117 = vmul.f32 %v93, %v65
  %v118 = vmul.f32 %v94, %v66
  %v119 = vadd.f32 %v117, %v118
  %v120 = vadd.f32 %v93, %v94
  %v121 = vadd.f32 %v65, %v66
  %v122 = vadd.f32 %v115, %v116
  %v123 = vld [vmem:[%s2] sm:$0xff]
  %v124 = vadd.f32 %v123, %v119
  %125 = vst [vmem:[%s2] sm:$0xff] %v124
  %s126 = scalar_lea.vmem %s2, 8
  %v127 = vld [vmem:[%s126] sm:$0xff]
  %v128 = vadd.f32 %v127, %v120
  %129 = vst [vmem:[%s126] sm:$0xff] %v128
  %s130 = scalar_lea.vmem %s2, 16
  %v131 = vld [vmem:[%s130] sm:$0xff]
  %v132 = vadd.f32 %v131, %v121
  %133 = vst [vmem:[%s130] sm:$0xff] %v132
  %s134 = scalar_lea.vmem %s2, 24
  %v135 = vld [vmem:[%s134] sm:$0xff]
  %v136 = vadd.f32 %v135, %v122
  %137 = vst [vmem:[%s134] sm:$0xff] %v136
  // Predicated region
  $region14: #{dice_bce_loss.1} parent=0 // pred_check
    _
  $region15: #{dice_bce_loss.1} parent=0 // pred_check_branch
    %139 = sbr.rel (0) target = $region17
  $region16: #{dice_bce_loss.1} parent=0 // pred_region
    _
  $region17: #{dice_bce_loss.1} parent=0 // pred_fallthru
    _
  // Predicated region
  $region18: #{dice_bce_loss.1} parent=0 // pred_check
    _
  $region19: #{dice_bce_loss.1} parent=0 // pred_check_branch
    %141 = sbr.rel (0) target = $region21
  $region20: #{dice_bce_loss.1} parent=0 // pred_region
    _
  $region21: #{dice_bce_loss.1} parent=0 // pred_fallthru
    _

</llo_original>
